<compile_context>
chip_gen: v5e
topology: v5e:2x2
jax: 0.10.0
libtpu: 0.0.40
codegen_flags: <defaults>
</compile_context>

<pallas_src>
import jax
import jax.numpy as jnp
import numpy as np
from jax.experimental import pallas as pl
from jax.experimental.pallas import tpu as pltpu

EPS = 1e-5  # PyTorch BatchNorm2d default eps


def _conv_weight_matrix(w_hwio, W):
    """(3,3,C,C) HWIO kernel -> (3*W*C, W*C) block-tridiagonal im2col weight.

    Row block ky (of size W*C) multiplies the y-shifted activations x[h+ky-1].
    Within a block, A_ky[w*C+ci, w'*C+co] = w[ky, w-w'+1, ci, co] for |w-w'|<=1
    (zero elsewhere), which implements the x-direction taps *and* the
    x-direction zero padding for free.
    """
    rows = []
    for ky in range(3):
        a = 0.0
        for kx in range(3):
            a = a + jnp.kron(jnp.eye(W, k=1 - kx, dtype=jnp.float32),
                             w_hwio[ky, kx].astype(jnp.float32))
        rows.append(a)
    return jnp.concatenate(rows, axis=0).astype(jnp.bfloat16)


def _boundary_masks(N, H):
    """(R,1) 0/1 masks killing rolled rows that crossed an image's y-edge."""
    h = np.arange(N * H) % H
    m_up = (h != 0).astype(np.float32).reshape(-1, 1)       # rows reading h-1 invalid at h==0
    m_dn = (h != H - 1).astype(np.float32).reshape(-1, 1)    # rows reading h+1 invalid at h==H-1
    return jnp.asarray(m_up), jnp.asarray(m_dn)


def residual_block_forward(x_nchw, params):
    """x_nchw: (N, C, H, W) float32; params: (w1, g1, b1, w2, g2, b2), w in HWIO."""
    w1, g1, b1, w2, g2, b2 = params
    N, C, H, W = x_nchw.shape
    R, L = N * H, W * C

    # NCHW -> NHWC -> lane-dense (N*H, W*C). (Producer-side layout plumbing;
    # in a real model the producer would emit this layout directly.)
    x2d = jnp.transpose(x_nchw, (0, 2, 3, 1)).reshape(R, L)

    # Trace-time constant operands (tiny: ~260 KiB total).
    a1 = _conv_weight_matrix(w1, W)                       # (3L, L) bf16
    a2 = _conv_weight_matrix(w2, W)                       # (3L, L) bf16
    m_up, m_dn = _boundary_masks(N, H)                    # (R, 1) f32 each
    fold = jnp.kron(jnp.ones((W, W), jnp.float32),
                    jnp.eye(C, dtype=jnp.float32))        # (L, L): per-channel fold+broadcast
    g1t = jnp.tile(g1.astype(jnp.float32), W).reshape(1, L)
    b1t = jnp.tile(b1.astype(jnp.float32), W).reshape(1, L)
    g2t = jnp.tile(g2.astype(jnp.float32), W).reshape(1, L)
    b2t = jnp.tile(b2.astype(jnp.float32), W).reshape(1, L)

    inv_cnt = 1.0 / float(N * H * W)

    def kernel(x_ref, mup_ref, mdn_ref, fold_ref,
               a1_ref, g1_ref, b1_ref, a2_ref, g2_ref, b2_ref, out_ref):
        x = x_ref[...]                                    # (R, L) f32, lane-dense
        msk_up = mup_ref[...]                             # (R, 1) f32
        msk_dn = mdn_ref[...]                             # (R, 1) f32

        def conv3x3_bn(inp, a_ref, g_ref, b_ref):
            # --- conv: one K=3L bf16 matmul (im2col) ---------------------------
            # y-shifts: sublane rolls (XLU) + boundary-mask multiply (VPU);
            # both slots are idle while the MXU runs the conv matmul.
            xb = inp.astype(jnp.bfloat16)
            x_up = (pltpu.roll(inp, shift=1, axis=0) * msk_up).astype(jnp.bfloat16)
            x_dn = (pltpu.roll(inp, shift=R - 1, axis=0) * msk_dn).astype(jnp.bfloat16)
            patches = jnp.concatenate([x_up, xb, x_dn], axis=1)      # (R, 3L) bf16
            acc = jnp.dot(patches, a_ref[...],
                          preferred_element_type=jnp.float32)        # (R, L) f32
            # --- fused training-mode BN: reduce first (f32), fold second -------
            sum_rows = jnp.sum(acc, axis=0, keepdims=True)           # (1, L) f32
            sumsq_rows = jnp.sum(acc * acc, axis=0, keepdims=True)   # (1, L) f32
            stats = jnp.concatenate([sum_rows, sumsq_rows], axis=0)  # (2, L)
            folded = jnp.dot(stats, fold_ref[...],
                             preferred_element_type=jnp.float32)     # (2, L) per-channel
            mean = folded[0:1, :] * inv_cnt
            var = folded[1:2, :] * inv_cnt - mean * mean             # biased variance
            scale = g_ref[...] * jax.lax.rsqrt(var + EPS)
            shift = b_ref[...] - mean * scale
            return acc * scale + shift                               # (R, L) f32

        h1 = jnp.maximum(conv3x3_bn(x, a1_ref, g1_ref, b1_ref), 0.0)
        h2 = conv3x3_bn(h1, a2_ref, g2_ref, b2_ref)
        out_ref[...] = jnp.maximum(h2 + x, 0.0).astype(out_ref.dtype)  # identity skip

    out2d = pl.pallas_call(
        kernel,
        out_shape=jax.ShapeDtypeStruct((R, L), jnp.float32),
        in_specs=[pl.BlockSpec(memory_space=pltpu.MemorySpace.VMEM)] * 10,
        out_specs=pl.BlockSpec(memory_space=pltpu.MemorySpace.VMEM),
        compiler_params=pltpu.CompilerParams(vmem_limit_bytes=4 * 1024 * 1024),
    )(x2d, m_up, m_dn, fold, a1, g1t, b1t, a2, g2t, b2t)

    return jnp.transpose(out2d.reshape(N, H, W, C), (0, 3, 1, 2))     # -> NCHW


def reference_forward(x_nchw, params):
    """Pure-JAX reference matching the PyTorch module (training-mode BN), f32."""
    w1, g1, b1, w2, g2, b2 = params
    x = jnp.transpose(x_nchw, (0, 2, 3, 1))

    def conv(y, w):
        return jax.lax.conv_general_dilated(
            y, w, window_strides=(1, 1), padding='SAME',
            dimension_numbers=('NHWC', 'HWIO', 'NHWC'))

    def bn(y, g, b):
        mu = jnp.mean(y, axis=(0, 1, 2), keepdims=True)
        var = jnp.mean((y - mu) ** 2, axis=(0, 1, 2), keepdims=True)
        return (y - mu) * jax.lax.rsqrt(var + EPS) * g + b

    h = jnp.maximum(bn(conv(x, w1), g1, b1), 0.0)
    h = bn(conv(h, w2), g2, b2)
    out = jnp.maximum(h + x, 0.0)
    return jnp.transpose(out, (0, 3, 1, 2))


if __name__ == "__main__":
    N, C, H, W = 2, 8, 16, 16   # in_ch == out_ch == 8; W*C = 128 (lane-dense)

    key = jax.random.PRNGKey(0)
    kx, kw1, kw2, kg1, kb1, kg2, kb2 = jax.random.split(key, 7)

    x = jax.random.normal(kx, (N, C, H, W), jnp.float32)
    # conv weights in HWIO layout (3, 3, Cin, Cout)
    w1 = 0.1 * jax.random.normal(kw1, (3, 3, C, C), jnp.float32)
    w2 = 0.1 * jax.random.normal(kw2, (3, 3, C, C), jnp.float32)
    g1 = 1.0 + 0.1 * jax.random.normal(kg1, (C,), jnp.float32)
    b1 = 0.1 * jax.random.normal(kb1, (C,), jnp.float32)
    g2 = 1.0 + 0.1 * jax.random.normal(kg2, (C,), jnp.float32)
    b2 = 0.1 * jax.random.normal(kb2, (C,), jnp.float32)
    params = (w1, g1, b1, w2, g2, b2)

    out = jax.block_until_ready(residual_block_forward(x, params))
    ref = jax.block_until_ready(reference_forward(x, params))

    assert out.shape == (N, C, H, W)
    assert bool(jnp.all(jnp.isfinite(out)))
    # bf16 MXU operands in the kernel vs. an all-f32 reference -> bf16-level tolerance.
    np.testing.assert_allclose(np.asarray(out), np.asarray(ref),
                               atol=5e-2, rtol=5e-2)

    print("KERNEL_OK")
</pallas_src>

<mosaic_0001>
module attributes {stable_mosaic.version = 11 : i64} {
  func.func @kernel(%arg0: memref<32x128xf32, #tpu.memory_space<vmem>>, %arg1: memref<32x1xf32, #tpu.memory_space<vmem>>, %arg2: memref<32x1xf32, #tpu.memory_space<vmem>>, %arg3: memref<128x128xf32, #tpu.memory_space<vmem>>, %arg4: memref<384x128xbf16, #tpu.memory_space<vmem>>, %arg5: memref<1x128xf32, #tpu.memory_space<vmem>>, %arg6: memref<1x128xf32, #tpu.memory_space<vmem>>, %arg7: memref<384x128xbf16, #tpu.memory_space<vmem>>, %arg8: memref<1x128xf32, #tpu.memory_space<vmem>>, %arg9: memref<1x128xf32, #tpu.memory_space<vmem>>, %arg10: memref<32x128xf32, #tpu.memory_space<vmem>>) attributes {dimension_semantics = [], scalar_prefetch = 0 : i64, scratch_operands = 0 : i64, tpu.core_type = #tpu.core_type<tc>} {
    %c0 = arith.constant 0 : index
    %c0_0 = arith.constant 0 : index
    %0 = vector.load %arg0[%c0, %c0_0] : memref<32x128xf32, #tpu.memory_space<vmem>>, vector<32x128xf32>
    %c0_1 = arith.constant 0 : index
    %c0_2 = arith.constant 0 : index
    %1 = vector.load %arg1[%c0_1, %c0_2] : memref<32x1xf32, #tpu.memory_space<vmem>>, vector<32x1xf32>
    %c0_3 = arith.constant 0 : index
    %c0_4 = arith.constant 0 : index
    %2 = vector.load %arg2[%c0_3, %c0_4] : memref<32x1xf32, #tpu.memory_space<vmem>>, vector<32x1xf32>
    %3 = arith.truncf %0 : vector<32x128xf32> to vector<32x128xbf16>
    %c1_i32 = arith.constant 1 : i32
    %4 = tpu.dynamic_rotate %0 by %c1_i32 dim 0 : vector<32x128xf32>, i32 -> vector<32x128xf32>
    %5 = vector.broadcast %1 : vector<32x1xf32> to vector<32x128xf32>
    %6 = arith.mulf %4, %5 : vector<32x128xf32>
    %7 = arith.truncf %6 : vector<32x128xf32> to vector<32x128xbf16>
    %c31_i32 = arith.constant 31 : i32
    %8 = tpu.dynamic_rotate %0 by %c31_i32 dim 0 : vector<32x128xf32>, i32 -> vector<32x128xf32>
    %9 = vector.broadcast %2 : vector<32x1xf32> to vector<32x128xf32>
    %10 = arith.mulf %8, %9 : vector<32x128xf32>
    %11 = arith.truncf %10 : vector<32x128xf32> to vector<32x128xbf16>
    %12 = tpu.concatenate %7, %3, %11 in 1 : vector<32x128xbf16>, vector<32x128xbf16>, vector<32x128xbf16> -> vector<32x384xbf16>
    %c0_5 = arith.constant 0 : index
    %c0_6 = arith.constant 0 : index
    %13 = vector.load %arg4[%c0_5, %c0_6] : memref<384x128xbf16, #tpu.memory_space<vmem>>, vector<384x128xbf16>
    %cst = arith.constant dense<0.000000e+00> : vector<32x128xf32>
    %14 = tpu.matmul %12, %13, %cst {dimension_numbers = #tpu.dot_dimension_numbers<[1], [0], [0], [1], [0, 0, 1, 1], [], []>} : vector<32x384xbf16>, vector<384x128xbf16>, vector<32x128xf32> -> vector<32x128xf32>
    %cst_7 = arith.constant dense<0.000000e+00> : vector<128xf32>
    %15 = vector.multi_reduction <add>, %14, %cst_7 [0] : vector<32x128xf32> to vector<128xf32>
    %16 = vector.shape_cast %15 : vector<128xf32> to vector<1x128xf32>
    %17 = arith.mulf %14, %14 : vector<32x128xf32>
    %cst_8 = arith.constant dense<0.000000e+00> : vector<128xf32>
    %18 = vector.multi_reduction <add>, %17, %cst_8 [0] : vector<32x128xf32> to vector<128xf32>
    %19 = vector.shape_cast %18 : vector<128xf32> to vector<1x128xf32>
    %20 = tpu.concatenate %16, %19 in 0 : vector<1x128xf32>, vector<1x128xf32> -> vector<2x128xf32>
    %c0_9 = arith.constant 0 : index
    %c0_10 = arith.constant 0 : index
    %21 = vector.load %arg3[%c0_9, %c0_10] : memref<128x128xf32, #tpu.memory_space<vmem>>, vector<128x128xf32>
    %cst_11 = arith.constant dense<0.000000e+00> : vector<2x128xf32>
    %22 = tpu.matmul %20, %21, %cst_11 {dimension_numbers = #tpu.dot_dimension_numbers<[1], [0], [0], [1], [0, 0, 1, 1], [], []>} : vector<2x128xf32>, vector<128x128xf32>, vector<2x128xf32> -> vector<2x128xf32>
    %23 = vector.extract_strided_slice %22 {offsets = [0, 0], sizes = [1, 128], strides = [1, 1]} : vector<2x128xf32> to vector<1x128xf32>
    %cst_12 = arith.constant 0.001953125 : f32
    %24 = vector.broadcast %cst_12 : f32 to vector<1x128xf32>
    %25 = arith.mulf %23, %24 : vector<1x128xf32>
    %26 = vector.extract_strided_slice %22 {offsets = [1, 0], sizes = [1, 128], strides = [1, 1]} : vector<2x128xf32> to vector<1x128xf32>
    %cst_13 = arith.constant 0.001953125 : f32
    %27 = vector.broadcast %cst_13 : f32 to vector<1x128xf32>
    %28 = arith.mulf %26, %27 : vector<1x128xf32>
    %29 = arith.mulf %25, %25 : vector<1x128xf32>
    %30 = arith.subf %28, %29 : vector<1x128xf32>
    %c0_14 = arith.constant 0 : index
    %c0_15 = arith.constant 0 : index
    %31 = vector.load %arg5[%c0_14, %c0_15] : memref<1x128xf32, #tpu.memory_space<vmem>>, vector<1x128xf32>
    %cst_16 = arith.constant 9.99999974E-6 : f32
    %32 = vector.broadcast %cst_16 : f32 to vector<1x128xf32>
    %33 = arith.addf %30, %32 : vector<1x128xf32>
    %34 = math.rsqrt %33 : vector<1x128xf32>
    %35 = arith.mulf %31, %34 : vector<1x128xf32>
    %c0_17 = arith.constant 0 : index
    %c0_18 = arith.constant 0 : index
    %36 = vector.load %arg6[%c0_17, %c0_18] : memref<1x128xf32, #tpu.memory_space<vmem>>, vector<1x128xf32>
    %37 = arith.mulf %25, %35 : vector<1x128xf32>
    %38 = arith.subf %36, %37 : vector<1x128xf32>
    %39 = vector.broadcast %35 : vector<1x128xf32> to vector<32x128xf32>
    %40 = arith.mulf %14, %39 : vector<32x128xf32>
    %41 = vector.broadcast %38 : vector<1x128xf32> to vector<32x128xf32>
    %42 = arith.addf %40, %41 : vector<32x128xf32>
    %cst_19 = arith.constant 0.000000e+00 : f32
    %43 = vector.broadcast %cst_19 : f32 to vector<32x128xf32>
    %44 = arith.maximumf %42, %43 : vector<32x128xf32>
    %45 = arith.truncf %44 : vector<32x128xf32> to vector<32x128xbf16>
    %c1_i32_20 = arith.constant 1 : i32
    %46 = tpu.dynamic_rotate %44 by %c1_i32_20 dim 0 : vector<32x128xf32>, i32 -> vector<32x128xf32>
    %47 = vector.broadcast %1 : vector<32x1xf32> to vector<32x128xf32>
    %48 = arith.mulf %46, %47 : vector<32x128xf32>
    %49 = arith.truncf %48 : vector<32x128xf32> to vector<32x128xbf16>
    %c31_i32_21 = arith.constant 31 : i32
    %50 = tpu.dynamic_rotate %44 by %c31_i32_21 dim 0 : vector<32x128xf32>, i32 -> vector<32x128xf32>
    %51 = vector.broadcast %2 : vector<32x1xf32> to vector<32x128xf32>
    %52 = arith.mulf %50, %51 : vector<32x128xf32>
    %53 = arith.truncf %52 : vector<32x128xf32> to vector<32x128xbf16>
    %54 = tpu.concatenate %49, %45, %53 in 1 : vector<32x128xbf16>, vector<32x128xbf16>, vector<32x128xbf16> -> vector<32x384xbf16>
    %c0_22 = arith.constant 0 : index
    %c0_23 = arith.constant 0 : index
    %55 = vector.load %arg7[%c0_22, %c0_23] : memref<384x128xbf16, #tpu.memory_space<vmem>>, vector<384x128xbf16>
    %cst_24 = arith.constant dense<0.000000e+00> : vector<32x128xf32>
    %56 = tpu.matmul %54, %55, %cst_24 {dimension_numbers = #tpu.dot_dimension_numbers<[1], [0], [0], [1], [0, 0, 1, 1], [], []>} : vector<32x384xbf16>, vector<384x128xbf16>, vector<32x128xf32> -> vector<32x128xf32>
    %cst_25 = arith.constant dense<0.000000e+00> : vector<128xf32>
    %57 = vector.multi_reduction <add>, %56, %cst_25 [0] : vector<32x128xf32> to vector<128xf32>
    %58 = vector.shape_cast %57 : vector<128xf32> to vector<1x128xf32>
    %59 = arith.mulf %56, %56 : vector<32x128xf32>
    %cst_26 = arith.constant dense<0.000000e+00> : vector<128xf32>
    %60 = vector.multi_reduction <add>, %59, %cst_26 [0] : vector<32x128xf32> to vector<128xf32>
    %61 = vector.shape_cast %60 : vector<128xf32> to vector<1x128xf32>
    %62 = tpu.concatenate %58, %61 in 0 : vector<1x128xf32>, vector<1x128xf32> -> vector<2x128xf32>
    %c0_27 = arith.constant 0 : index
    %c0_28 = arith.constant 0 : index
    %63 = vector.load %arg3[%c0_27, %c0_28] : memref<128x128xf32, #tpu.memory_space<vmem>>, vector<128x128xf32>
    %cst_29 = arith.constant dense<0.000000e+00> : vector<2x128xf32>
    %64 = tpu.matmul %62, %63, %cst_29 {dimension_numbers = #tpu.dot_dimension_numbers<[1], [0], [0], [1], [0, 0, 1, 1], [], []>} : vector<2x128xf32>, vector<128x128xf32>, vector<2x128xf32> -> vector<2x128xf32>
    %65 = vector.extract_strided_slice %64 {offsets = [0, 0], sizes = [1, 128], strides = [1, 1]} : vector<2x128xf32> to vector<1x128xf32>
    %cst_30 = arith.constant 0.001953125 : f32
    %66 = vector.broadcast %cst_30 : f32 to vector<1x128xf32>
    %67 = arith.mulf %65, %66 : vector<1x128xf32>
    %68 = vector.extract_strided_slice %64 {offsets = [1, 0], sizes = [1, 128], strides = [1, 1]} : vector<2x128xf32> to vector<1x128xf32>
    %cst_31 = arith.constant 0.001953125 : f32
    %69 = vector.broadcast %cst_31 : f32 to vector<1x128xf32>
    %70 = arith.mulf %68, %69 : vector<1x128xf32>
    %71 = arith.mulf %67, %67 : vector<1x128xf32>
    %72 = arith.subf %70, %71 : vector<1x128xf32>
    %c0_32 = arith.constant 0 : index
    %c0_33 = arith.constant 0 : index
    %73 = vector.load %arg8[%c0_32, %c0_33] : memref<1x128xf32, #tpu.memory_space<vmem>>, vector<1x128xf32>
    %cst_34 = arith.constant 9.99999974E-6 : f32
    %74 = vector.broadcast %cst_34 : f32 to vector<1x128xf32>
    %75 = arith.addf %72, %74 : vector<1x128xf32>
    %76 = math.rsqrt %75 : vector<1x128xf32>
    %77 = arith.mulf %73, %76 : vector<1x128xf32>
    %c0_35 = arith.constant 0 : index
    %c0_36 = arith.constant 0 : index
    %78 = vector.load %arg9[%c0_35, %c0_36] : memref<1x128xf32, #tpu.memory_space<vmem>>, vector<1x128xf32>
    %79 = arith.mulf %67, %77 : vector<1x128xf32>
    %80 = arith.subf %78, %79 : vector<1x128xf32>
    %81 = vector.broadcast %77 : vector<1x128xf32> to vector<32x128xf32>
    %82 = arith.mulf %56, %81 : vector<32x128xf32>
    %83 = vector.broadcast %80 : vector<1x128xf32> to vector<32x128xf32>
    %84 = arith.addf %82, %83 : vector<32x128xf32>
    %85 = arith.addf %84, %0 : vector<32x128xf32>
    %cst_37 = arith.constant 0.000000e+00 : f32
    %86 = vector.broadcast %cst_37 : f32 to vector<32x128xf32>
    %87 = arith.maximumf %85, %86 : vector<32x128xf32>
    %c0_38 = arith.constant 0 : index
    %c0_39 = arith.constant 0 : index
    %88 = vector.load %arg10[%c0_38, %c0_39] : memref<32x128xf32, #tpu.memory_space<vmem>>, vector<32x128xf32>
    tpu.vector_store %arg10[%c0_38, %c0_39], %87 {strides = array<i32>} : memref<32x128xf32, #tpu.memory_space<vmem>>, vector<32x128xf32>,
    return
  }
}

</mosaic_0001>

<llo_original>
// kernel: tpu_custom_call.1
$region0: #{tpu_custom_call.1}
  #allocation0 [shape = 'u32[]', space=smem, size = 0x4, offset = 0x4, fixed_abs, tag = 'smem constant byte address 0x4 - core index']
  #allocation1 [shape = 'u32[72,128]{1,0:T(1,128)}', space=vmem, size = 0x9000, scoped, tag = 'internal scratch']
  %s0 = inlined_call_operand.vmem [shape: f32[32,128], index: 0, kind: input, shape index: {}]
  %s1 = inlined_call_operand.vmem [shape: f32[32,1], index: 1, kind: input, shape index: {}]
  %s2 = inlined_call_operand.vmem [shape: f32[32,1], index: 2, kind: input, shape index: {}]
  %s3 = inlined_call_operand.hbm [shape: f32[128,128], index: 3, kind: input, shape index: {}]
  %s4 = inlined_call_operand.hbm [shape: bf16[384,128], index: 4, kind: input, shape index: {}]
  %s5 = inlined_call_operand.vmem [shape: f32[1,128], index: 5, kind: input, shape index: {}]
  %s6 = inlined_call_operand.vmem [shape: f32[1,128], index: 6, kind: input, shape index: {}]
  %s7 = inlined_call_operand.hbm [shape: bf16[384,128], index: 7, kind: input, shape index: {}]
  %s8 = inlined_call_operand.vmem [shape: f32[1,128], index: 8, kind: input, shape index: {}]
  %s9 = inlined_call_operand.vmem [shape: f32[1,128], index: 9, kind: input, shape index: {}]
  %s10 = inlined_call_operand.hbm [shape: f32[32,128], index: 10, kind: output, shape index: {}]
  %s11 = sld [smem:[#allocation0]]
  $region62: #{tpu_custom_call.1} parent=0
    _
  %s13 = ssub.s32 1, %s11
  %s14 = scalar_select 0, %s13, %s11
  $region1: #{tpu_custom_call.1} parent=0
    #allocation2 [shape = 'u8[65536]{0}', space=vmem, size = 0x10000, scoped, tag = 'input window, operand 3, single buffered']
    #allocation3 [shape = 's32[1]{0}', space=sflag, size = 0x4, scoped, tag = 'scoped memory for tpu_custom_call.1']
    #allocation4 [shape = 's32[1]{0}', space=sflag, size = 0x4, scoped, tag = 'scoped memory for tpu_custom_call.1']
    #allocation5 [shape = 'u8[98304]{0}', space=vmem, size = 0x18000, scoped, tag = 'input window, operand 4, single buffered']
    #allocation6 [shape = 's32[1]{0}', space=sflag, size = 0x4, scoped, tag = 'scoped memory for tpu_custom_call.1']
    #allocation7 [shape = 'u8[98304]{0}', space=vmem, size = 0x18000, scoped, tag = 'input window, operand 7, single buffered']
    #allocation8 [shape = 'u8[16384]{0}', space=vmem, size = 0x4000, scoped, tag = 'output window, operand 0, single buffered']
    %15 = vsyncpa [#allocation3], 0
    %16 = vsyncpa [#allocation6], 0
    %17 = vsyncpa [#allocation4], 0
    // Predicated region
    $region2: #{tpu_custom_call.1} parent=1 // pred_check
      _
    $region3: #{tpu_custom_call.1} parent=1 // pred_check_branch
      %19 = sbr.rel (0) target = $region5
    $region4: #{tpu_custom_call.1} parent=1 // pred_region
      _
    $region5: #{tpu_custom_call.1} parent=1 // pred_fallthru
      _
    // Predicated region
    $region6: #{tpu_custom_call.1} parent=1 // pred_check
      _
    $region7: #{tpu_custom_call.1} parent=1 // pred_check_branch
      %21 = sbr.rel (0) target = $region9
    $region8: #{tpu_custom_call.1} parent=1 // pred_region
      _
    $region9: #{tpu_custom_call.1} parent=1 // pred_fallthru
      _
    // Predicated region
    $region10: #{tpu_custom_call.1} parent=1 // pred_check
      _
    $region11: #{tpu_custom_call.1} parent=1 // pred_check_branch
      %23 = sbr.rel (0) target = $region13
    $region12: #{tpu_custom_call.1} parent=1 // pred_region
      _
    $region13: #{tpu_custom_call.1} parent=1 // pred_fallthru
      _
    // Predicated region
    $region14: #{tpu_custom_call.1} parent=1 // pred_check
      _
    $region15: #{tpu_custom_call.1} parent=1 // pred_check_branch
      %25 = sbr.rel (0) target = $region17
    $region16: #{tpu_custom_call.1} parent=1 // pred_region
      %27 = vsyncadd [#allocation3], 0
      %s28 = sshll.u32 %s3, 4
      %s29 = int_to_ptr.hbm [resolvable:$true] %s28
      %s30 = sshll.u32 [#allocation2], 4
      %s31 = int_to_ptr.vmem [resolvable:$true] %s30
      %36 = dma.hbm_to_vmem [thread:$0]  %s29, 2048, %s31, [#allocation3], 128, 128, 8
    $region17: #{tpu_custom_call.1} parent=1 // pred_fallthru
      _
    // Predicated region
    $region18: #{tpu_custom_call.1} parent=1 // pred_check
      _
    $region19: #{tpu_custom_call.1} parent=1 // pred_check_branch
      %38 = sbr.rel (0) target = $region21
    $region20: #{tpu_custom_call.1} parent=1 // pred_region
      %40 = vsyncadd [#allocation6], 0
      %s41 = sshll.u32 %s4, 4
      %s42 = int_to_ptr.hbm [resolvable:$true] %s41
      %s43 = sshll.u32 [#allocation5], 4
      %s44 = int_to_ptr.vmem [resolvable:$true] %s43
      %49 = dma.hbm_to_vmem [thread:$0]  %s42, 3072, %s44, [#allocation6], 64, 64, 4
    $region21: #{tpu_custom_call.1} parent=1 // pred_fallthru
      _
    // Predicated region
    $region22: #{tpu_custom_call.1} parent=1 // pred_check
      _
    $region23: #{tpu_custom_call.1} parent=1 // pred_check_branch
      %51 = sbr.rel (0) target = $region25
    $region24: #{tpu_custom_call.1} parent=1 // pred_region
      _
    $region25: #{tpu_custom_call.1} parent=1 // pred_fallthru
      _
    // Predicated region
    $region26: #{tpu_custom_call.1} parent=1 // pred_check
      _
    $region27: #{tpu_custom_call.1} parent=1 // pred_check_branch
      %53 = sbr.rel (0) target = $region29
    $region28: #{tpu_custom_call.1} parent=1 // pred_region
      _
    $region29: #{tpu_custom_call.1} parent=1 // pred_fallthru
      _
    // Predicated region
    $region30: #{tpu_custom_call.1} parent=1 // pred_check
      _
    $region31: #{tpu_custom_call.1} parent=1 // pred_check_branch
      %55 = sbr.rel (0) target = $region33
    $region32: #{tpu_custom_call.1} parent=1 // pred_region
      %57 = vsyncadd [#allocation6], 0
      %s58 = sshll.u32 %s7, 4
      %s59 = int_to_ptr.hbm [resolvable:$true] %s58
      %s60 = sshll.u32 [#allocation7], 4
      %s61 = int_to_ptr.vmem [resolvable:$true] %s60
      %66 = dma.hbm_to_vmem [thread:$0]  %s59, 3072, %s61, [#allocation6], 64, 64, 4
    $region33: #{tpu_custom_call.1} parent=1 // pred_fallthru
      _
    // Predicated region
    $region34: #{tpu_custom_call.1} parent=1 // pred_check
      _
    $region35: #{tpu_custom_call.1} parent=1 // pred_check_branch
      %68 = sbr.rel (0) target = $region37
    $region36: #{tpu_custom_call.1} parent=1 // pred_region
      _
    $region37: #{tpu_custom_call.1} parent=1 // pred_fallthru
      _
    // Predicated region
    $region38: #{tpu_custom_call.1} parent=1 // pred_check
      _
    $region39: #{tpu_custom_call.1} parent=1 // pred_check_branch
      %70 = sbr.rel (0) target = $region41
    $region40: #{tpu_custom_call.1} parent=1 // pred_region
      _
    $region41: #{tpu_custom_call.1} parent=1 // pred_fallthru
      _
    // Predicated region
    $region42: #{tpu_custom_call.1} parent=1 // pred_check
      _
    $region43: #{tpu_custom_call.1} parent=1 // pred_check_branch
      %72 = sbr.rel (0) target = $region45
    $region44: #{tpu_custom_call.1} parent=1 // pred_region
      %74 = dma.done [#allocation3], 2048
    $region45: #{tpu_custom_call.1} parent=1 // pred_fallthru
      _
    // Predicated region
    $region46: #{tpu_custom_call.1} parent=1 // pred_check
      _
    $region47: #{tpu_custom_call.1} parent=1 // pred_check_branch
      %76 = sbr.rel (0) target = $region49
    $region48: #{tpu_custom_call.1} parent=1 // pred_region
      %78 = dma.done [#allocation6], 3072
    $region49: #{tpu_custom_call.1} parent=1 // pred_fallthru
      _
    // Predicated region
    $region50: #{tpu_custom_call.1} parent=1 // pred_check
      _
    $region51: #{tpu_custom_call.1} parent=1 // pred_check_branch
      %80 = sbr.rel (0) target = $region53
    $region52: #{tpu_custom_call.1} parent=1 // pred_region
      %82 = dma.done [#allocation6], 3072
    $region53: #{tpu_custom_call.1} parent=1 // pred_fallthru
      _
    %v83 = vld [vmem:[%s0] sm:$0xff]
    %v84 = vld [vmem:[%s0 + $0x8] sm:$0xff]
    %v85 = vld [vmem:[%s0 + $0x10] sm:$0xff]
    %v86 = vld [vmem:[%s0 + $0x18] sm:$0xff]
    %v87 = vld [vmem:[%s1] sm:$0xff]
    %v88 = vld [vmem:[%s1 + $0x8] sm:$0xff]
    %v89 = vld [vmem:[%s1 + $0x10] sm:$0xff]
    %v90 = vld [vmem:[%s1 + $0x18] sm:$0xff]
    %v91 = vld [vmem:[%s2] sm:$0xff]
    %v92 = vld [vmem:[%s2 + $0x8] sm:$0xff]
    %v93 = vld [vmem:[%s2 + $0x10] sm:$0xff]
    %v94 = vld [vmem:[%s2 + $0x18] sm:$0xff]
    %v95 = vpack.c.bf16 %v83, %v83
    %v96 = vpack.c.bf16 %v84, %v84
    %v97 = vpack.c.bf16 %v85, %v85
    %v98 = vpack.c.bf16 %v86, %v86
    %v99 = vrot.slane %v83, 7
    %v100 = vrot.slane %v84, 7
    %v101 = vrot.slane %v85, 7
    %v102 = vrot.slane %v86, 7
    %v103 = vlaneseq
    %v104 = vshrl.u32 %v103, 7
    %vm105 = vcmp.lt.s32.totalorder %v104, 1
    %v106 = vsel %vm105, %v101, %v102
    %v107 = vsel %vm105, %v100, %v101
    %v108 = vsel %vm105, %v99, %v100
    %v109 = vsel %vm105, %v102, %v99
    %111 = vset.pattern.permute.xlu0 0
    %112 = vperm.xlu0 %111, %v87
    %v113 = vpop.permute.xlu0 %112
    %116 = vset.pattern.permute.xlu0 0
    %117 = vperm.xlu0 %116, %v88
    %v118 = vpop.permute.xlu0 %117
    %121 = vset.pattern.permute.xlu0 0
    %122 = vperm.xlu0 %121, %v89
    %v123 = vpop.permute.xlu0 %122
    %126 = vset.pattern.permute.xlu0 0
    %127 = vperm.xlu0 %126, %v90
    %v128 = vpop.permute.xlu0 %127
    %v130 = vmul.f32 %v109, %v113
    %v131 = vmul.f32 %v108, %v118
    %v132 = vmul.f32 %v107, %v123
    %v133 = vmul.f32 %v106, %v128
    %v134 = vpack.c.bf16 %v130, %v130
    %v135 = vpack.c.bf16 %v131, %v131
    %v136 = vpack.c.bf16 %v132, %v132
    %v137 = vpack.c.bf16 %v133, %v133
    %v138 = vrot.slane %v83, 1
    %v139 = vrot.slane %v84, 1
    %v140 = vrot.slane %v85, 1
    %v141 = vrot.slane %v86, 1
    %vm142 = vcmp.lt.s32.totalorder %v104, 7
    %v143 = vsel %vm142, %v140, %v141
    %v144 = vsel %vm142, %v139, %v140
    %v145 = vsel %vm142, %v138, %v139
    %v146 = vsel %vm142, %v141, %v138
    %148 = vset.pattern.permute.xlu0 0
    %149 = vperm.xlu0 %148, %v91
    %v150 = vpop.permute.xlu0 %149
    %153 = vset.pattern.permute.xlu0 0
    %154 = vperm.xlu0 %153, %v92
    %v155 = vpop.permute.xlu0 %154
    %158 = vset.pattern.permute.xlu0 0
    %159 = vperm.xlu0 %158, %v93
    %v160 = vpop.permute.xlu0 %159
    %163 = vset.pattern.permute.xlu0 0
    %164 = vperm.xlu0 %163, %v94
    %v165 = vpop.permute.xlu0 %164
    %v167 = vmul.f32 %v145, %v150
    %v168 = vmul.f32 %v144, %v155
    %v169 = vmul.f32 %v143, %v160
    %v170 = vmul.f32 %v146, %v165
    %v171 = vpack.c.bf16 %v167, %v167
    %v172 = vpack.c.bf16 %v168, %v168
    %v173 = vpack.c.bf16 %v169, %v169
    %v174 = vpack.c.bf16 %v170, %v170
    %v179 = vunpack.c.l.b16 %v134
    %v180 = vunpack.c.l.b16 %v135
    %v181 = vunpack.c.l.b16 %v136
    %v182 = vunpack.c.l.b16 %v137
    %v183 = vpack.c.b16 %v180, %v179
    %v184 = vpack.c.b16 %v182, %v181
    %v191 = vunpack.c.l.b16 %v95
    %v192 = vunpack.c.l.b16 %v96
    %v193 = vunpack.c.l.b16 %v97
    %v194 = vunpack.c.l.b16 %v98
    %v195 = vpack.c.b16 %v192, %v191
    %v196 = vpack.c.b16 %v194, %v193
    %v203 = vunpack.c.l.b16 %v171
    %v204 = vunpack.c.l.b16 %v172
    %v205 = vunpack.c.l.b16 %v173
    %v206 = vunpack.c.l.b16 %v174
    %v207 = vpack.c.b16 %v204, %v203
    %v208 = vpack.c.b16 %v206, %v205
    %v211 = vld [vmem:[#allocation5] sm:$0xf]
    %v212 = vld [vmem:[#allocation5 + $0x4] sm:$0xf]
    %v213 = vld [vmem:[#allocation5 + $0x8] sm:$0xf]
    %v214 = vld [vmem:[#allocation5 + $0xc] sm:$0xf]
    %v215 = vld [vmem:[#allocation5 + $0x10] sm:$0xf]
    %v216 = vld [vmem:[#allocation5 + $0x14] sm:$0xf]
    %v217 = vld [vmem:[#allocation5 + $0x18] sm:$0xf]
    %v218 = vld [vmem:[#allocation5 + $0x1c] sm:$0xf]
    %v219 = vld [vmem:[#allocation5 + $0x20] sm:$0xf]
    %v220 = vld [vmem:[#allocation5 + $0x24] sm:$0xf]
    %v221 = vld [vmem:[#allocation5 + $0x28] sm:$0xf]
    %v222 = vld [vmem:[#allocation5 + $0x2c] sm:$0xf]
    %v223 = vld [vmem:[#allocation5 + $0x30] sm:$0xf]
    %v224 = vld [vmem:[#allocation5 + $0x34] sm:$0xf]
    %v225 = vld [vmem:[#allocation5 + $0x38] sm:$0xf]
    %v226 = vld [vmem:[#allocation5 + $0x3c] sm:$0xf]
    %v227 = vld [vmem:[#allocation5 + $0x40] sm:$0xf]
    %v228 = vld [vmem:[#allocation5 + $0x44] sm:$0xf]
    %v229 = vld [vmem:[#allocation5 + $0x48] sm:$0xf]
    %v230 = vld [vmem:[#allocation5 + $0x4c] sm:$0xf]
    %v231 = vld [vmem:[#allocation5 + $0x50] sm:$0xf]
    %v232 = vld [vmem:[#allocation5 + $0x54] sm:$0xf]
    %v233 = vld [vmem:[#allocation5 + $0x58] sm:$0xf]
    %v234 = vld [vmem:[#allocation5 + $0x5c] sm:$0xf]
    %v235 = vld [vmem:[#allocation5 + $0x60] sm:$0xf]
    %v236 = vld [vmem:[#allocation5 + $0x64] sm:$0xf]
    %v237 = vld [vmem:[#allocation5 + $0x68] sm:$0xf]
    %v238 = vld [vmem:[#allocation5 + $0x6c] sm:$0xf]
    %v239 = vld [vmem:[#allocation5 + $0x70] sm:$0xf]
    %v240 = vld [vmem:[#allocation5 + $0x74] sm:$0xf]
    %v241 = vld [vmem:[#allocation5 + $0x78] sm:$0xf]
    %v242 = vld [vmem:[#allocation5 + $0x7c] sm:$0xf]
    %v243 = vld [vmem:[#allocation5 + $0x80] sm:$0xf]
    %v244 = vld [vmem:[#allocation5 + $0x84] sm:$0xf]
    %v245 = vld [vmem:[#allocation5 + $0x88] sm:$0xf]
    %v246 = vld [vmem:[#allocation5 + $0x8c] sm:$0xf]
    %v247 = vld [vmem:[#allocation5 + $0x90] sm:$0xf]
    %v248 = vld [vmem:[#allocation5 + $0x94] sm:$0xf]
    %v249 = vld [vmem:[#allocation5 + $0x98] sm:$0xf]
    %v250 = vld [vmem:[#allocation5 + $0x9c] sm:$0xf]
    %v251 = vld [vmem:[#allocation5 + $0xa0] sm:$0xf]
    %v252 = vld [vmem:[#allocation5 + $0xa4] sm:$0xf]
    %v253 = vld [vmem:[#allocation5 + $0xa8] sm:$0xf]
    %v254 = vld [vmem:[#allocation5 + $0xac] sm:$0xf]
    %v255 = vld [vmem:[#allocation5 + $0xb0] sm:$0xf]
    %v256 = vld [vmem:[#allocation5 + $0xb4] sm:$0xf]
    %v257 = vld [vmem:[#allocation5 + $0xb8] sm:$0xf]
    %v258 = vld [vmem:[#allocation5 + $0xbc] sm:$0xf]
    %v307 = vunpack.c.l.b16 %v211
    %v308 = vunpack.c.l.b16 %v212
    %v309 = vunpack.c.l.b16 %v213
    %v310 = vunpack.c.l.b16 %v214
    %v311 = vunpack.c.l.b16 %v215
    %v312 = vunpack.c.l.b16 %v216
    %v313 = vunpack.c.l.b16 %v217
    %v314 = vunpack.c.l.b16 %v218
    %v315 = vunpack.c.l.b16 %v219
    %v316 = vunpack.c.l.b16 %v220
    %v317 = vunpack.c.l.b16 %v221
    %v318 = vunpack.c.l.b16 %v222
    %v319 = vunpack.c.l.b16 %v223
    %v320 = vunpack.c.l.b16 %v224
    %v321 = vunpack.c.l.b16 %v225
    %v322 = vunpack.c.l.b16 %v226
    %v323 = vunpack.c.l.b16 %v227
    %v324 = vunpack.c.l.b16 %v228
    %v325 = vunpack.c.l.b16 %v229
    %v326 = vunpack.c.l.b16 %v230
    %v327 = vunpack.c.l.b16 %v231
    %v328 = vunpack.c.l.b16 %v232
    %v329 = vunpack.c.l.b16 %v233
    %v330 = vunpack.c.l.b16 %v234
    %v331 = vunpack.c.l.b16 %v235
    %v332 = vunpack.c.l.b16 %v236
    %v333 = vunpack.c.l.b16 %v237
    %v334 = vunpack.c.l.b16 %v238
    %v335 = vunpack.c.l.b16 %v239
    %v336 = vunpack.c.l.b16 %v240
    %v337 = vunpack.c.l.b16 %v241
    %v338 = vunpack.c.l.b16 %v242
    %v339 = vunpack.c.l.b16 %v243
    %v340 = vunpack.c.l.b16 %v244
    %v341 = vunpack.c.l.b16 %v245
    %v342 = vunpack.c.l.b16 %v246
    %v343 = vunpack.c.l.b16 %v247
    %v344 = vunpack.c.l.b16 %v248
    %v345 = vunpack.c.l.b16 %v249
    %v346 = vunpack.c.l.b16 %v250
    %v347 = vunpack.c.l.b16 %v251
    %v348 = vunpack.c.l.b16 %v252
    %v349 = vunpack.c.l.b16 %v253
    %v350 = vunpack.c.l.b16 %v254
    %v351 = vunpack.c.l.b16 %v255
    %v352 = vunpack.c.l.b16 %v256
    %v353 = vunpack.c.l.b16 %v257
    %v354 = vunpack.c.l.b16 %v258
    %v355 = vpack.c.b16 %v308, %v307
    %v356 = vpack.c.b16 %v310, %v309
    %v357 = vpack.c.b16 %v312, %v311
    %v358 = vpack.c.b16 %v314, %v313
    %v359 = vpack.c.b16 %v316, %v315
    %v360 = vpack.c.b16 %v318, %v317
    %v361 = vpack.c.b16 %v320, %v319
    %v362 = vpack.c.b16 %v322, %v321
    %v363 = vpack.c.b16 %v324, %v323
    %v364 = vpack.c.b16 %v326, %v325
    %v365 = vpack.c.b16 %v328, %v327
    %v366 = vpack.c.b16 %v330, %v329
    %v367 = vpack.c.b16 %v332, %v331
    %v368 = vpack.c.b16 %v334, %v333
    %v369 = vpack.c.b16 %v336, %v335
    %v370 = vpack.c.b16 %v338, %v337
    %v371 = vpack.c.b16 %v340, %v339
    %v372 = vpack.c.b16 %v342, %v341
    %v373 = vpack.c.b16 %v344, %v343
    %v374 = vpack.c.b16 %v346, %v345
    %v375 = vpack.c.b16 %v348, %v347
    %v376 = vpack.c.b16 %v350, %v349
    %v377 = vpack.c.b16 %v352, %v351
    %v378 = vpack.c.b16 %v354, %v353
    %403 = vmatpush.bf16.msra.mxu0 %v362
    %404 = vmatpush.bf16.msra.mxu0 %v361
    %405 = vmatpush.bf16.msra.mxu0 %v360
    %406 = vmatpush.bf16.msra.mxu0 %v359
    %407 = vmatpush.bf16.msra.mxu0 %v358
    %408 = vmatpush.bf16.msra.mxu0 %v357
    %409 = vmatpush.bf16.msra.mxu0 %v356
    %410 = vmatpush.bf16.msra.mxu0 %v355
    %411 = vmatmul.bf16.gmra.mxu0 %v183
    %v412 = vpop.f32.mrf.mxu0
    %v413 = vadd.f32 0.0, %v412
    %v414 = vpop.f32.mrf.mxu0
    %v415 = vadd.f32 0.0, %v414
    %416 = vmatmul.bf16.gmra.mxu0 %v184
    %v417 = vpop.f32.mrf.mxu0
    %v418 = vadd.f32 0.0, %v417
    %v419 = vpop.f32.mrf.mxu0
    %v420 = vadd.f32 0.0, %v419
    %421 = vdwg.mxu0
    %422 = vmatpush.bf16.msra.mxu0 %v370
    %423 = vmatpush.bf16.msra.mxu0 %v369
    %424 = vmatpush.bf16.msra.mxu0 %v368
    %425 = vmatpush.bf16.msra.mxu0 %v367
    %426 = vmatpush.bf16.msra.mxu0 %v366
    %427 = vmatpush.bf16.msra.mxu0 %v365
    %428 = vmatpush.bf16.msra.mxu0 %v364
    %429 = vmatpush.bf16.msra.mxu0 %v363
    %430 = vmatmul.bf16.gmra.mxu0 %v195
    %v431 = vpop.f32.mrf.mxu0
    %v432 = vadd.f32 %v413, %v431
    %v433 = vpop.f32.mrf.mxu0
    %v434 = vadd.f32 %v415, %v433
    %435 = vmatmul.bf16.gmra.mxu0 %v196
    %v436 = vpop.f32.mrf.mxu0
    %v437 = vadd.f32 %v418, %v436
    %v438 = vpop.f32.mrf.mxu0
    %v439 = vadd.f32 %v420, %v438
    %440 = vdwg.mxu0
    %441 = vmatpush.bf16.msra.mxu0 %v378
    %442 = vmatpush.bf16.msra.mxu0 %v377
    %443 = vmatpush.bf16.msra.mxu0 %v376
    %444 = vmatpush.bf16.msra.mxu0 %v375
    %445 = vmatpush.bf16.msra.mxu0 %v374
    %446 = vmatpush.bf16.msra.mxu0 %v373
    %447 = vmatpush.bf16.msra.mxu0 %v372
    %448 = vmatpush.bf16.msra.mxu0 %v371
    %449 = vmatmul.bf16.gmra.mxu0 %v207
    %v450 = vpop.f32.mrf.mxu0
    %v451 = vadd.f32 %v432, %v450
    %v452 = vpop.f32.mrf.mxu0
    %v453 = vadd.f32 %v434, %v452
    %454 = vmatmul.bf16.gmra.mxu0 %v208
    %v455 = vpop.f32.mrf.mxu0
    %v456 = vadd.f32 %v437, %v455
    %v457 = vpop.f32.mrf.mxu0
    %v458 = vadd.f32 %v439, %v457
    %459 = vdwg.mxu0
    %v460 = vadd.f32 %v451, %v453
    %v461 = vadd.f32 %v460, %v456
    %v462 = vadd.f32 %v461, %v458
    %v463 = vrot.slane %v462, 4
    %v464 = vadd.f32 %v462, %v463
    %v465 = vrot.slane %v464, 2
    %v466 = vadd.f32 %v464, %v465
    %v467 = vrot.slane %v466, 1
    %v468 = vadd.f32 %v466, %v467
    %v469 = vmul.f32 %v451, %v451
    %v470 = vmul.f32 %v453, %v453
    %v471 = vmul.f32 %v456, %v456
    %v472 = vmul.f32 %v458, %v458
    %v473 = vadd.f32 %v469, %v470
    %v474 = vadd.f32 %v473, %v471
    %v475 = vadd.f32 %v474, %v472
    %v476 = vrot.slane %v475, 4
    %v477 = vadd.f32 %v475, %v476
    %v478 = vrot.slane %v477, 2
    %v479 = vadd.f32 %v477, %v478
    %v480 = vrot.slane %v479, 1
    %v481 = vadd.f32 %v479, %v480
    %vm482 = vcmask 1040384
    %v483 = vsel %vm482, %v468, %v481
    %v484 = vld [vmem:[#allocation2] sm:$0xff]
    %v485 = vld [vmem:[#allocation2 + $0x8] sm:$0xff]
    %v486 = vld [vmem:[#allocation2 + $0x10] sm:$0xff]
    %v487 = vld [vmem:[#allocation2 + $0x18] sm:$0xff]
    %v488 = vld [vmem:[#allocation2 + $0x20] sm:$0xff]
    %v489 = vld [vmem:[#allocation2 + $0x28] sm:$0xff]
    %v490 = vld [vmem:[#allocation2 + $0x30] sm:$0xff]
    %v491 = vld [vmem:[#allocation2 + $0x38] sm:$0xff]
    %v492 = vld [vmem:[#allocation2 + $0x40] sm:$0xff]
    %v493 = vld [vmem:[#allocation2 + $0x48] sm:$0xff]
    %v494 = vld [vmem:[#allocation2 + $0x50] sm:$0xff]
    %v495 = vld [vmem:[#allocation2 + $0x58] sm:$0xff]
    %v496 = vld [vmem:[#allocation2 + $0x60] sm:$0xff]
    %v497 = vld [vmem:[#allocation2 + $0x68] sm:$0xff]
    %v498 = vld [vmem:[#allocation2 + $0x70] sm:$0xff]
    %v499 = vld [vmem:[#allocation2 + $0x78] sm:$0xff]
    %500 = vmatpush.msra.mxu0 %v499
    %501 = vmatpush.msra.mxu0 %v498
    %502 = vmatpush.msra.mxu0 %v497
    %503 = vmatpush.msra.mxu0 %v496
    %504 = vmatpush.msra.mxu0 %v495
    %505 = vmatpush.msra.mxu0 %v494
    %506 = vmatpush.msra.mxu0 %v493
    %507 = vmatpush.msra.mxu0 %v492
    %508 = vmatpush.msra.mxu0 %v491
    %509 = vmatpush.msra.mxu0 %v490
    %510 = vmatpush.msra.mxu0 %v489
    %511 = vmatpush.msra.mxu0 %v488
    %512 = vmatpush.msra.mxu0 %v487
    %513 = vmatpush.msra.mxu0 %v486
    %514 = vmatpush.msra.mxu0 %v485
    %515 = vmatpush.msra.mxu0 %v484
    %516 = vmatmul.f32.gmra.mxu0 %v483
    %v517 = vpop.f32.mrf.mxu0
    %v518 = vadd.f32 0.0, %v517
    %519 = vdwg.mxu0
    %v520 = vmul.f32 %v518, 0.001953125
    %v521 = vmul.f32 %v520, %v520
    %v523 = vrot.slane %v521, 7
    %v525 = vsub.f32 %v520, %v523
    %v526 = vld [vmem:[%s5] sm:$0x1]
    %v527 = vadd.f32 %v525, 1e-05
    %v528 = vrsqrt.pop %v527
    %v529 = vmul.f32 %v528, %v527
    %v530 = vmul.f32 %v529, %v528
    %v531 = vmul.f32 0.5, %v530
    %v532 = vsub.f32 1.5, %v531
    %v533 = vmul.f32 %v528, %v532
    %vm534 = vweird.f32 %v527
    %vm535 = vweird.f32 %v528
    %vm536 = vmor %vm534, %vm535
    %v537 = vsel %vm536, %v528, %v533
    %539 = vst [vmem:[#allocation1] sm:$0xff] %v537
    %s540 = scalar_lea.vmem [#allocation1], 1
    %v541 = vld [vmem:[%s540] ss:$9 sm:$0xff]
    %v543 = vmul.f32 %v526, %v541
    %v544 = vld [vmem:[%s6] sm:$0x1]
    %v545 = vmul.f32 %v520, %v543
    %v546 = vsub.f32 %v544, %v545
    %v548 = vperm.slane %v543, 0
    %v550 = vmul.f32 %v451, %v548
    %v551 = vmul.f32 %v453, %v548
    %v552 = vmul.f32 %v456, %v548
    %v553 = vmul.f32 %v458, %v548
    %v555 = vperm.slane %v546, 0
    %v557 = vadd.f32 %v550, %v555
    %v558 = vadd.f32 %v551, %v555
    %v559 = vadd.f32 %v552, %v555
    %v560 = vadd.f32 %v553, %v555
    %v561 = vmax.f32 %v557, 0.0
    %v562 = vmax.f32 %v558, 0.0
    %v563 = vmax.f32 %v559, 0.0
    %v564 = vmax.f32 %v560, 0.0
    %v565 = vpack.c.bf16 %v561, %v561
    %v566 = vpack.c.bf16 %v562, %v562
    %v567 = vpack.c.bf16 %v563, %v563
    %v568 = vpack.c.bf16 %v564, %v564
    %v569 = vrot.slane %v561, 7
    %v570 = vrot.slane %v562, 7
    %v571 = vrot.slane %v563, 7
    %v572 = vrot.slane %v564, 7
    %v573 = vsel %vm105, %v571, %v572
    %v574 = vsel %vm105, %v570, %v571
    %v575 = vsel %vm105, %v569, %v570
    %v576 = vsel %vm105, %v572, %v569
    %v577 = vmul.f32 %v576, %v113
    %v578 = vmul.f32 %v575, %v118
    %v579 = vmul.f32 %v574, %v123
    %v580 = vmul.f32 %v573, %v128
    %v581 = vpack.c.bf16 %v577, %v577
    %v582 = vpack.c.bf16 %v578, %v578
    %v583 = vpack.c.bf16 %v579, %v579
    %v584 = vpack.c.bf16 %v580, %v580
    %v585 = vrot.slane %v561, 1
    %v586 = vrot.slane %v562, 1
    %v587 = vrot.slane %v563, 1
    %v588 = vrot.slane %v564, 1
    %v589 = vsel %vm142, %v587, %v588
    %v590 = vsel %vm142, %v586, %v587
    %v591 = vsel %vm142, %v585, %v586
    %v592 = vsel %vm142, %v588, %v585
    %v593 = vmul.f32 %v591, %v150
    %v594 = vmul.f32 %v590, %v155
    %v595 = vmul.f32 %v589, %v160
    %v596 = vmul.f32 %v592, %v165
    %v597 = vpack.c.bf16 %v593, %v593
    %v598 = vpack.c.bf16 %v594, %v594
    %v599 = vpack.c.bf16 %v595, %v595
    %v600 = vpack.c.bf16 %v596, %v596
    %v605 = vunpack.c.l.b16 %v581
    %v606 = vunpack.c.l.b16 %v582
    %v607 = vunpack.c.l.b16 %v583
    %v608 = vunpack.c.l.b16 %v584
    %v609 = vpack.c.b16 %v606, %v605
    %v610 = vpack.c.b16 %v608, %v607
    %v617 = vunpack.c.l.b16 %v565
    %v618 = vunpack.c.l.b16 %v566
    %v619 = vunpack.c.l.b16 %v567
    %v620 = vunpack.c.l.b16 %v568
    %v621 = vpack.c.b16 %v618, %v617
    %v622 = vpack.c.b16 %v620, %v619
    %v629 = vunpack.c.l.b16 %v597
    %v630 = vunpack.c.l.b16 %v598
    %v631 = vunpack.c.l.b16 %v599
    %v632 = vunpack.c.l.b16 %v600
    %v633 = vpack.c.b16 %v630, %v629
    %v634 = vpack.c.b16 %v632, %v631
    %v637 = vld [vmem:[#allocation7] sm:$0xf]
    %v638 = vld [vmem:[#allocation7 + $0x4] sm:$0xf]
    %v639 = vld [vmem:[#allocation7 + $0x8] sm:$0xf]
    %v640 = vld [vmem:[#allocation7 + $0xc] sm:$0xf]
    %v641 = vld [vmem:[#allocation7 + $0x10] sm:$0xf]
    %v642 = vld [vmem:[#allocation7 + $0x14] sm:$0xf]
    %v643 = vld [vmem:[#allocation7 + $0x18] sm:$0xf]
    %v644 = vld [vmem:[#allocation7 + $0x1c] sm:$0xf]
    %v645 = vld [vmem:[#allocation7 + $0x20] sm:$0xf]
    %v646 = vld [vmem:[#allocation7 + $0x24] sm:$0xf]
    %v647 = vld [vmem:[#allocation7 + $0x28] sm:$0xf]
    %v648 = vld [vmem:[#allocation7 + $0x2c] sm:$0xf]
    %v649 = vld [vmem:[#allocation7 + $0x30] sm:$0xf]
    %v650 = vld [vmem:[#allocation7 + $0x34] sm:$0xf]
    %v651 = vld [vmem:[#allocation7 + $0x38] sm:$0xf]
    %v652 = vld [vmem:[#allocation7 + $0x3c] sm:$0xf]
    %v653 = vld [vmem:[#allocation7 + $0x40] sm:$0xf]
    %v654 = vld [vmem:[#allocation7 + $0x44] sm:$0xf]
    %v655 = vld [vmem:[#allocation7 + $0x48] sm:$0xf]
    %v656 = vld [vmem:[#allocation7 + $0x4c] sm:$0xf]
    %v657 = vld [vmem:[#allocation7 + $0x50] sm:$0xf]
    %v658 = vld [vmem:[#allocation7 + $0x54] sm:$0xf]
    %v659 = vld [vmem:[#allocation7 + $0x58] sm:$0xf]
    %v660 = vld [vmem:[#allocation7 + $0x5c] sm:$0xf]
    %v661 = vld [vmem:[#allocation7 + $0x60] sm:$0xf]
    %v662 = vld [vmem:[#allocation7 + $0x64] sm:$0xf]
    %v663 = vld [vmem:[#allocation7 + $0x68] sm:$0xf]
    %v664 = vld [vmem:[#allocation7 + $0x6c] sm:$0xf]
    %v665 = vld [vmem:[#allocation7 + $0x70] sm:$0xf]
    %v666 = vld [vmem:[#allocation7 + $0x74] sm:$0xf]
    %v667 = vld [vmem:[#allocation7 + $0x78] sm:$0xf]
    %v668 = vld [vmem:[#allocation7 + $0x7c] sm:$0xf]
    %v669 = vld [vmem:[#allocation7 + $0x80] sm:$0xf]
    %v670 = vld [vmem:[#allocation7 + $0x84] sm:$0xf]
    %v671 = vld [vmem:[#allocation7 + $0x88] sm:$0xf]
    %v672 = vld [vmem:[#allocation7 + $0x8c] sm:$0xf]
    %v673 = vld [vmem:[#allocation7 + $0x90] sm:$0xf]
    %v674 = vld [vmem:[#allocation7 + $0x94] sm:$0xf]
    %v675 = vld [vmem:[#allocation7 + $0x98] sm:$0xf]
    %v676 = vld [vmem:[#allocation7 + $0x9c] sm:$0xf]
    %v677 = vld [vmem:[#allocation7 + $0xa0] sm:$0xf]
    %v678 = vld [vmem:[#allocation7 + $0xa4] sm:$0xf]
    %v679 = vld [vmem:[#allocation7 + $0xa8] sm:$0xf]
    %v680 = vld [vmem:[#allocation7 + $0xac] sm:$0xf]
    %v681 = vld [vmem:[#allocation7 + $0xb0] sm:$0xf]
    %v682 = vld [vmem:[#allocation7 + $0xb4] sm:$0xf]
    %v683 = vld [vmem:[#allocation7 + $0xb8] sm:$0xf]
    %v684 = vld [vmem:[#allocation7 + $0xbc] sm:$0xf]
    %v733 = vunpack.c.l.b16 %v637
    %v734 = vunpack.c.l.b16 %v638
    %v735 = vunpack.c.l.b16 %v639
    %v736 = vunpack.c.l.b16 %v640
    %v737 = vunpack.c.l.b16 %v641
    %v738 = vunpack.c.l.b16 %v642
    %v739 = vunpack.c.l.b16 %v643
    %v740 = vunpack.c.l.b16 %v644
    %v741 = vunpack.c.l.b16 %v645
    %v742 = vunpack.c.l.b16 %v646
    %v743 = vunpack.c.l.b16 %v647
    %v744 = vunpack.c.l.b16 %v648
    %v745 = vunpack.c.l.b16 %v649
    %v746 = vunpack.c.l.b16 %v650
    %v747 = vunpack.c.l.b16 %v651
    %v748 = vunpack.c.l.b16 %v652
    %v749 = vunpack.c.l.b16 %v653
    %v750 = vunpack.c.l.b16 %v654
    %v751 = vunpack.c.l.b16 %v655
    %v752 = vunpack.c.l.b16 %v656
    %v753 = vunpack.c.l.b16 %v657
    %v754 = vunpack.c.l.b16 %v658
    %v755 = vunpack.c.l.b16 %v659
    %v756 = vunpack.c.l.b16 %v660
    %v757 = vunpack.c.l.b16 %v661
    %v758 = vunpack.c.l.b16 %v662
    %v759 = vunpack.c.l.b16 %v663
    %v760 = vunpack.c.l.b16 %v664
    %v761 = vunpack.c.l.b16 %v665
    %v762 = vunpack.c.l.b16 %v666
    %v763 = vunpack.c.l.b16 %v667
    %v764 = vunpack.c.l.b16 %v668
    %v765 = vunpack.c.l.b16 %v669
    %v766 = vunpack.c.l.b16 %v670
    %v767 = vunpack.c.l.b16 %v671
    %v768 = vunpack.c.l.b16 %v672
    %v769 = vunpack.c.l.b16 %v673
    %v770 = vunpack.c.l.b16 %v674
    %v771 = vunpack.c.l.b16 %v675
    %v772 = vunpack.c.l.b16 %v676
    %v773 = vunpack.c.l.b16 %v677
    %v774 = vunpack.c.l.b16 %v678
    %v775 = vunpack.c.l.b16 %v679
    %v776 = vunpack.c.l.b16 %v680
    %v777 = vunpack.c.l.b16 %v681
    %v778 = vunpack.c.l.b16 %v682
    %v779 = vunpack.c.l.b16 %v683
    %v780 = vunpack.c.l.b16 %v684
    %v781 = vpack.c.b16 %v734, %v733
    %v782 = vpack.c.b16 %v736, %v735
    %v783 = vpack.c.b16 %v738, %v737
    %v784 = vpack.c.b16 %v740, %v739
    %v785 = vpack.c.b16 %v742, %v741
    %v786 = vpack.c.b16 %v744, %v743
    %v787 = vpack.c.b16 %v746, %v745
    %v788 = vpack.c.b16 %v748, %v747
    %v789 = vpack.c.b16 %v750, %v749
    %v790 = vpack.c.b16 %v752, %v751
    %v791 = vpack.c.b16 %v754, %v753
    %v792 = vpack.c.b16 %v756, %v755
    %v793 = vpack.c.b16 %v758, %v757
    %v794 = vpack.c.b16 %v760, %v759
    %v795 = vpack.c.b16 %v762, %v761
    %v796 = vpack.c.b16 %v764, %v763
    %v797 = vpack.c.b16 %v766, %v765
    %v798 = vpack.c.b16 %v768, %v767
    %v799 = vpack.c.b16 %v770, %v769
    %v800 = vpack.c.b16 %v772, %v771
    %v801 = vpack.c.b16 %v774, %v773
    %v802 = vpack.c.b16 %v776, %v775
    %v803 = vpack.c.b16 %v778, %v777
    %v804 = vpack.c.b16 %v780, %v779
    %829 = vmatpush.bf16.msra.mxu0 %v788
    %830 = vmatpush.bf16.msra.mxu0 %v787
    %831 = vmatpush.bf16.msra.mxu0 %v786
    %832 = vmatpush.bf16.msra.mxu0 %v785
    %833 = vmatpush.bf16.msra.mxu0 %v784
    %834 = vmatpush.bf16.msra.mxu0 %v783
    %835 = vmatpush.bf16.msra.mxu0 %v782
    %836 = vmatpush.bf16.msra.mxu0 %v781
    %837 = vmatmul.bf16.gmra.mxu0 %v609
    %v838 = vpop.f32.mrf.mxu0
    %v839 = vadd.f32 0.0, %v838
    %v840 = vpop.f32.mrf.mxu0
    %v841 = vadd.f32 0.0, %v840
    %842 = vmatmul.bf16.gmra.mxu0 %v610
    %v843 = vpop.f32.mrf.mxu0
    %v844 = vadd.f32 0.0, %v843
    %v845 = vpop.f32.mrf.mxu0
    %v846 = vadd.f32 0.0, %v845
    %847 = vdwg.mxu0
    %848 = vmatpush.bf16.msra.mxu0 %v796
    %849 = vmatpush.bf16.msra.mxu0 %v795
    %850 = vmatpush.bf16.msra.mxu0 %v794
    %851 = vmatpush.bf16.msra.mxu0 %v793
    %852 = vmatpush.bf16.msra.mxu0 %v792
    %853 = vmatpush.bf16.msra.mxu0 %v791
    %854 = vmatpush.bf16.msra.mxu0 %v790
    %855 = vmatpush.bf16.msra.mxu0 %v789
    %856 = vmatmul.bf16.gmra.mxu0 %v621
    %v857 = vpop.f32.mrf.mxu0
    %v858 = vadd.f32 %v839, %v857
    %v859 = vpop.f32.mrf.mxu0
    %v860 = vadd.f32 %v841, %v859
    %861 = vmatmul.bf16.gmra.mxu0 %v622
    %v862 = vpop.f32.mrf.mxu0
    %v863 = vadd.f32 %v844, %v862
    %v864 = vpop.f32.mrf.mxu0
    %v865 = vadd.f32 %v846, %v864
    %866 = vdwg.mxu0
    %867 = vmatpush.bf16.msra.mxu0 %v804
    %868 = vmatpush.bf16.msra.mxu0 %v803
    %869 = vmatpush.bf16.msra.mxu0 %v802
    %870 = vmatpush.bf16.msra.mxu0 %v801
    %871 = vmatpush.bf16.msra.mxu0 %v800
    %872 = vmatpush.bf16.msra.mxu0 %v799
    %873 = vmatpush.bf16.msra.mxu0 %v798
    %874 = vmatpush.bf16.msra.mxu0 %v797
    %875 = vmatmul.bf16.gmra.mxu0 %v633
    %v876 = vpop.f32.mrf.mxu0
    %v877 = vadd.f32 %v858, %v876
    %v878 = vpop.f32.mrf.mxu0
    %v879 = vadd.f32 %v860, %v878
    %880 = vmatmul.bf16.gmra.mxu0 %v634
    %v881 = vpop.f32.mrf.mxu0
    %v882 = vadd.f32 %v863, %v881
    %v883 = vpop.f32.mrf.mxu0
    %v884 = vadd.f32 %v865, %v883
    %885 = vdwg.mxu0
    %v886 = vadd.f32 %v877, %v879
    %v887 = vadd.f32 %v886, %v882
    %v888 = vadd.f32 %v887, %v884
    %v889 = vrot.slane %v888, 4
    %v890 = vadd.f32 %v888, %v889
    %v891 = vrot.slane %v890, 2
    %v892 = vadd.f32 %v890, %v891
    %v893 = vrot.slane %v892, 1
    %v894 = vadd.f32 %v892, %v893
    %v895 = vmul.f32 %v877, %v877
    %v896 = vmul.f32 %v879, %v879
    %v897 = vmul.f32 %v882, %v882
    %v898 = vmul.f32 %v884, %v884
    %v899 = vadd.f32 %v895, %v896
    %v900 = vadd.f32 %v899, %v897
    %v901 = vadd.f32 %v900, %v898
    %v902 = vrot.slane %v901, 4
    %v903 = vadd.f32 %v901, %v902
    %v904 = vrot.slane %v903, 2
    %v905 = vadd.f32 %v903, %v904
    %v906 = vrot.slane %v905, 1
    %v907 = vadd.f32 %v905, %v906
    %v908 = vsel %vm482, %v894, %v907
    %909 = vmatpush.msra.mxu0 %v499
    %910 = vmatpush.msra.mxu0 %v498
    %911 = vmatpush.msra.mxu0 %v497
    %912 = vmatpush.msra.mxu0 %v496
    %913 = vmatpush.msra.mxu0 %v495
    %914 = vmatpush.msra.mxu0 %v494
    %915 = vmatpush.msra.mxu0 %v493
    %916 = vmatpush.msra.mxu0 %v492
    %917 = vmatpush.msra.mxu0 %v491
    %918 = vmatpush.msra.mxu0 %v490
    %919 = vmatpush.msra.mxu0 %v489
    %920 = vmatpush.msra.mxu0 %v488
    %921 = vmatpush.msra.mxu0 %v487
    %922 = vmatpush.msra.mxu0 %v486
    %923 = vmatpush.msra.mxu0 %v485
    %924 = vmatpush.msra.mxu0 %v484
    %925 = vmatmul.f32.gmra.mxu0 %v908
    %v926 = vpop.f32.mrf.mxu0
    %v927 = vadd.f32 0.0, %v926
    %928 = vdwg.mxu0
    %v929 = vmul.f32 %v927, 0.001953125
    %v930 = vmul.f32 %v929, %v929
    %v932 = vrot.slane %v930, 7
    %v934 = vsub.f32 %v929, %v932
    %v935 = vld [vmem:[%s8] sm:$0x1]
    %v936 = vadd.f32 %v934, 1e-05
    %v937 = vrsqrt.pop %v936
    %v938 = vmul.f32 %v937, %v936
    %v939 = vmul.f32 %v938, %v937
    %v940 = vmul.f32 0.5, %v939
    %v941 = vsub.f32 1.5, %v940
    %v942 = vmul.f32 %v937, %v941
    %vm943 = vweird.f32 %v936
    %vm944 = vweird.f32 %v937
    %vm945 = vmor %vm943, %vm944
    %v946 = vsel %vm945, %v937, %v942
    %948 = vst [vmem:[#allocation1] sm:$0xff] %v946
    %s949 = scalar_lea.vmem [#allocation1], 1
    %v950 = vld [vmem:[%s949] ss:$9 sm:$0xff]
    %v952 = vmul.f32 %v935, %v950
    %v953 = vld [vmem:[%s9] sm:$0x1]
    %v954 = vmul.f32 %v929, %v952
    %v955 = vsub.f32 %v953, %v954
    %v957 = vperm.slane %v952, 0
    %v959 = vmul.f32 %v877, %v957
    %v960 = vmul.f32 %v879, %v957
    %v961 = vmul.f32 %v882, %v957
    %v962 = vmul.f32 %v884, %v957
    %v964 = vperm.slane %v955, 0
    %v966 = vadd.f32 %v959, %v964
    %v967 = vadd.f32 %v960, %v964
    %v968 = vadd.f32 %v961, %v964
    %v969 = vadd.f32 %v962, %v964
    %v970 = vadd.f32 %v966, %v83
    %v971 = vadd.f32 %v967, %v84
    %v972 = vadd.f32 %v968, %v85
    %v973 = vadd.f32 %v969, %v86
    %v974 = vmax.f32 %v970, 0.0
    %v975 = vmax.f32 %v971, 0.0
    %v976 = vmax.f32 %v972, 0.0
    %v977 = vmax.f32 %v973, 0.0
    %978 = vst [vmem:[#allocation8] sm:$0xff] %v974
    %979 = vst [vmem:[#allocation8 + $0x8] sm:$0xff] %v975
    %980 = vst [vmem:[#allocation8 + $0x10] sm:$0xff] %v976
    %981 = vst [vmem:[#allocation8 + $0x18] sm:$0xff] %v977
    // Predicated region
    $region54: #{tpu_custom_call.1} parent=1 // pred_check
      _
    $region55: #{tpu_custom_call.1} parent=1 // pred_check_branch
      %983 = sbr.rel (0) target = $region57
    $region56: #{tpu_custom_call.1} parent=1 // pred_region
      %985 = vsyncadd [#allocation4], 0
      %s986 = sshll.u32 [#allocation8], 4
      %s987 = int_to_ptr.vmem [resolvable:$true] %s986
      %s988 = sshll.u32 %s10, 4
      %s989 = int_to_ptr.hbm [resolvable:$true] %s988
      %994 = dma.vmem_to_hbm [thread:$0]  %s987, 512, %s989, [#allocation4], 128, 128, 8
    $region57: #{tpu_custom_call.1} parent=1 // pred_fallthru
      _
    // Predicated region
    $region58: #{tpu_custom_call.1} parent=1 // pred_check
      _
    $region59: #{tpu_custom_call.1} parent=1 // pred_check_branch
      %996 = sbr.rel (0) target = $region61
    $region60: #{tpu_custom_call.1} parent=1 // pred_region
      %998 = dma.done [#allocation4], 512
    $region61: #{tpu_custom_call.1} parent=1 // pred_fallthru
      _
    %999 = vsyncpa [#allocation3], 1
    %1000 = vsyncpa [#allocation6], 1
    %1001 = vsyncpa [#allocation4], 1

</llo_original>
